<compile_context>
chip_gen: v7x
topology: tpu7x:2x2x1
jax: 0.10.0
libtpu: 0.0.40
codegen_flags: <defaults>
</compile_context>

<pallas_src>
import math
from functools import partial

import jax
import jax.numpy as jnp
from jax import lax
from jax.experimental import pallas as pl
from jax.experimental.pallas import tpu as pltpu

_VMEM_LIMIT = 32 * 1024 * 1024  # legal on v5e (raises 16 MiB default), safe on v7x


# ---------------------------------------------------------------------------
# ALiBi slope initialization (mirrors AlibiPositionalBias._get_slopes).
# ---------------------------------------------------------------------------
def _get_alibi_slopes(heads):
    def pow2_slopes(n):
        start = 2.0 ** (-(2.0 ** -(math.log2(n) - 3)))
        return [start * (start ** i) for i in range(n)]

    if math.log2(heads).is_integer():
        return pow2_slopes(heads)
    closest = 2 ** math.floor(math.log2(heads))
    return (pow2_slopes(closest)
            + pow2_slopes(2 * closest)[0::2][: heads - closest])


def _pick_tile(n, max_tile, align):
    """Largest `align`-aligned tile <= min(n, max_tile); full extent if n <= align."""
    if n <= align:
        return n  # full-extent block (legal even when smaller than align)
    return min(max_tile, (n // align) * align)


# ---------------------------------------------------------------------------
# Tiled path kernel: grid (B, H, I/ti, J/tj), B/H squeezed away.
# ---------------------------------------------------------------------------
def _alibi_kernel_tiled(slopes_ref, qk_ref, o_ref, *, j_minus_i):
    tile_i, tile_j = qk_ref.shape
    h = pl.program_id(1)
    ti = pl.program_id(2)
    tj = pl.program_id(3)

    # rel = global_j - (J - I + global_i)  =>  out = qk - slope * |rel|
    delta = (tj * tile_j - ti * tile_i - j_minus_i).astype(jnp.float32)
    a = lax.broadcasted_iota(jnp.int32, (tile_i, 1), 0).astype(jnp.float32)
    c = lax.broadcasted_iota(jnp.int32, (1, tile_j), 1).astype(jnp.float32)
    rel = (c + delta) - a                                   # (tile_i, tile_j)

    slope = slopes_ref[h]                                   # scalar from SMEM
    o_ref[...] = (qk_ref[...].astype(jnp.float32)
                  - slope * jnp.abs(rel)).astype(o_ref.dtype)


def _alibi_tiled(qk_dots, slopes):
    B, H, I, J = qk_dots.shape
    align_i = 8 * max(1, 4 // qk_dots.dtype.itemsize)       # 8 f32 / 16 bf16 / 32 int8
    tile_i = _pick_tile(I, 512, align_i)
    tile_j = _pick_tile(J, 1024, 128)                       # lane-dense stores
    grid = (B, H, pl.cdiv(I, tile_i), pl.cdiv(J, tile_j))

    blk = (pl.Squeezed(), pl.Squeezed(), tile_i, tile_j)
    idx = lambda b, h, ti, tj, slopes_ref: (b, h, ti, tj)
    kernel = partial(_alibi_kernel_tiled, j_minus_i=J - I)

    return pl.pallas_call(
        kernel,
        out_shape=jax.ShapeDtypeStruct(qk_dots.shape, qk_dots.dtype),
        grid_spec=pltpu.PrefetchScalarGridSpec(
            num_scalar_prefetch=1,
            grid=grid,
            in_specs=[pl.BlockSpec(blk, idx)],
            out_specs=pl.BlockSpec(blk, idx),
        ),
        # operand 0 is the scalar-prefetch slopes; operand 1 (qk_dots) aliases out 0.
        input_output_aliases={1: 0},
        compiler_params=pltpu.CompilerParams(
            dimension_semantics=("parallel", "parallel", "parallel", "parallel"),
            vmem_limit_bytes=_VMEM_LIMIT,
        ),
    )(slopes, qk_dots)


# ---------------------------------------------------------------------------
# Folded path kernel (small I or J): rows = B*H*I folded into the sublane axis.
# ---------------------------------------------------------------------------
def _alibi_kernel_folded(slope_ref, shift_ref, qk_ref, o_ref):
    # slope_ref / shift_ref: (tile_r, 1) f32; qk_ref / o_ref: (tile_r, tile_j)
    tile_j = qk_ref.shape[-1]
    tj = pl.program_id(1)
    c = (lax.broadcasted_iota(jnp.int32, (1, tile_j), 1).astype(jnp.float32)
         + (tj * tile_j).astype(jnp.float32))
    rel = c - shift_ref[...]                                 # (tile_r, tile_j)
    o_ref[...] = (qk_ref[...].astype(jnp.float32)
                  - slope_ref[...] * jnp.abs(rel)).astype(o_ref.dtype)


def _alibi_folded(qk_dots, slopes):
    B, H, I, J = qk_dots.shape
    R = B * H * I
    qk2 = qk_dots.reshape(R, J)

    # Per-row slope and per-row bias shift: bias[r, j] = -|j - shift_row[r]|.
    i_row = jnp.tile(jnp.arange(I, dtype=jnp.float32), B * H)
    shift_row = (i_row + jnp.float32(J - I)).reshape(R, 1)
    slope_row = jnp.broadcast_to(slopes[None, :, None], (B, H, I)).reshape(R, 1)

    tile_r = _pick_tile(R, 512, 8)
    tile_j = _pick_tile(J, 1024, 128)
    grid = (pl.cdiv(R, tile_r), pl.cdiv(J, tile_j))

    out2 = pl.pallas_call(
        _alibi_kernel_folded,
        out_shape=jax.ShapeDtypeStruct((R, J), qk_dots.dtype),
        grid=grid,
        in_specs=[
            pl.BlockSpec((tile_r, 1), lambda r, c: (r, 0)),
            pl.BlockSpec((tile_r, 1), lambda r, c: (r, 0)),
            pl.BlockSpec((tile_r, tile_j), lambda r, c: (r, c)),
        ],
        out_specs=pl.BlockSpec((tile_r, tile_j), lambda r, c: (r, c)),
        input_output_aliases={2: 0},
        compiler_params=pltpu.CompilerParams(
            dimension_semantics=("parallel", "parallel"),
            vmem_limit_bytes=_VMEM_LIMIT,
        ),
    )(slope_row, shift_row, qk2)
    return out2.reshape(B, H, I, J)


# ---------------------------------------------------------------------------
# Public wrapper (forward of LearnedAlibiPositionalBias).
# ---------------------------------------------------------------------------
def learned_alibi_bias(qk_dots, learned_logslopes):
    """qk_dots: (B, H, I, J); learned_logslopes: (heads,) or (heads, 1, 1)."""
    B, H, I, J = qk_dots.shape
    slopes = jnp.exp(learned_logslopes.reshape(-1).astype(jnp.float32))
    slopes = jnp.pad(slopes, (0, H - slopes.shape[0]))  # extra heads -> zero slope

    if I < 8 or J < 128:
        return _alibi_folded(qk_dots, slopes)
    return _alibi_tiled(qk_dots, slopes)


# ---------------------------------------------------------------------------
# Pure-JAX reference mirroring the PyTorch forward.
# ---------------------------------------------------------------------------
def learned_alibi_bias_ref(qk_dots, learned_logslopes):
    B, H, I, J = qk_dots.shape
    i_ar = jnp.arange(J - I, J)
    j_ar = jnp.arange(J)
    bias = -jnp.abs(j_ar[None, :] - i_ar[:, None]).astype(jnp.float32)  # (I, J)
    slopes = jnp.exp(learned_logslopes.reshape(-1).astype(jnp.float32))
    slopes = jnp.pad(slopes, (0, H - slopes.shape[0]))
    out = (qk_dots.astype(jnp.float32)
           + slopes[None, :, None, None] * bias[None, None, :, :])
    return out.astype(qk_dots.dtype)


if __name__ == "__main__":
    master = jax.random.PRNGKey(0)
    case_keys = jax.random.split(master, 3)

    def run_case(key, B, H, I, J):
        kq, kn = jax.random.split(key)
        qk = jax.random.normal(kq, (B, H, I, J), dtype=jnp.float32)
        init_logslopes = jnp.log(jnp.asarray(_get_alibi_slopes(H), dtype=jnp.float32))
        logslopes = (init_logslopes
                     + 0.1 * jax.random.normal(kn, (H,), dtype=jnp.float32)
                     ).reshape(H, 1, 1)
        # Reference first (and blocked) so input aliasing can never affect it.
        ref = jax.block_until_ready(learned_alibi_bias_ref(qk, logslopes))
        out = jax.block_until_ready(learned_alibi_bias(qk, logslopes))
        assert out.shape == (B, H, I, J)
        assert jnp.allclose(out, ref, atol=1e-5, rtol=1e-5), f"mismatch at {(B, H, I, J)}"

    # Small shape (module-scale test): folded (B*H*I, J) path.
    run_case(case_keys[0], 2, 4, 8, 8)
    # Larger shape: tiled path with lane-dense >=128-wide blocks and head indexing.
    run_case(case_keys[1], 1, 4, 64, 256)
    # Non-divisible J: exercises cdiv-grid partial-block boundary handling.
    run_case(case_keys[2], 1, 2, 24, 200)

    print("KERNEL_OK")
</pallas_src>

<mosaic_0001>
module attributes {stable_mosaic.version = 11 : i64} {
  func.func @_alibi_kernel_folded(%arg0: i32, %arg1: i32, %arg2: memref<64x1xf32, #tpu.memory_space<vmem>>, %arg3: memref<64x1xf32, #tpu.memory_space<vmem>>, %arg4: memref<64x8xf32, #tpu.memory_space<vmem>>, %arg5: memref<64x8xf32, #tpu.memory_space<vmem>>) attributes {dimension_semantics = [#tpu.dimension_semantics<parallel>, #tpu.dimension_semantics<parallel>], iteration_bounds = array<i64: 1, 1>, scalar_prefetch = 0 : i64, scratch_operands = 0 : i64, tpu.core_type = #tpu.core_type<tc>, window_params = [{transform_indices = @transform_0, window_bounds = array<i64: 64, 1>}, {transform_indices = @transform_1, window_bounds = array<i64: 64, 1>}, {transform_indices = @transform_2, window_bounds = array<i64: 64, 8>}, {transform_indices = @transform_3, window_bounds = array<i64: 64, 8>}]} {
    %0 = tpu.iota {dimensions = array<i32: 1>} : vector<1x8xi32>
    %1 = arith.sitofp %0 : vector<1x8xi32> to vector<1x8xf32>
    %c8_i32 = arith.constant 8 : i32
    %2 = arith.muli %arg1, %c8_i32 : i32
    %3 = arith.sitofp %2 : i32 to f32
    %4 = vector.broadcast %3 : f32 to vector<1x8xf32>
    %5 = arith.addf %1, %4 : vector<1x8xf32>
    %c0 = arith.constant 0 : index
    %c0_0 = arith.constant 0 : index
    %6 = vector.load %arg3[%c0, %c0_0] : memref<64x1xf32, #tpu.memory_space<vmem>>, vector<64x1xf32>
    %7 = vector.broadcast %5 : vector<1x8xf32> to vector<64x8xf32>
    %8 = vector.broadcast %6 : vector<64x1xf32> to vector<64x8xf32>
    %9 = arith.subf %7, %8 : vector<64x8xf32>
    %c0_1 = arith.constant 0 : index
    %c0_2 = arith.constant 0 : index
    %10 = vector.load %arg4[%c0_1, %c0_2] : memref<64x8xf32, #tpu.memory_space<vmem>>, vector<64x8xf32>
    %c0_3 = arith.constant 0 : index
    %c0_4 = arith.constant 0 : index
    %11 = vector.load %arg2[%c0_3, %c0_4] : memref<64x1xf32, #tpu.memory_space<vmem>>, vector<64x1xf32>
    %12 = math.absf %9 : vector<64x8xf32>
    %13 = vector.broadcast %11 : vector<64x1xf32> to vector<64x8xf32>
    %14 = arith.mulf %13, %12 : vector<64x8xf32>
    %15 = arith.subf %10, %14 : vector<64x8xf32>
    %c0_5 = arith.constant 0 : index
    %c0_6 = arith.constant 0 : index
    %16 = vector.load %arg5[%c0_5, %c0_6] : memref<64x8xf32, #tpu.memory_space<vmem>>, vector<64x8xf32>
    tpu.vector_store %arg5[%c0_5, %c0_6], %15 {strides = array<i32>} : memref<64x8xf32, #tpu.memory_space<vmem>>, vector<64x8xf32>,
    return
  }
  func.func @transform_0(%arg0: i32, %arg1: i32) -> (i32, i32) {
    %c0_i32 = arith.constant 0 : i32
    %c0_i32_0 = arith.constant 0 : i32
    return %arg0, %c0_i32 : i32, i32
  }
  func.func @transform_1(%arg0: i32, %arg1: i32) -> (i32, i32) {
    %c0_i32 = arith.constant 0 : i32
    %c0_i32_0 = arith.constant 0 : i32
    return %arg0, %c0_i32 : i32, i32
  }
  func.func @transform_2(%arg0: i32, %arg1: i32) -> (i32, i32) {
    %c0_i32 = arith.constant 0 : i32
    return %arg0, %arg1 : i32, i32
  }
  func.func @transform_3(%arg0: i32, %arg1: i32) -> (i32, i32) {
    %c0_i32 = arith.constant 0 : i32
    return %arg0, %arg1 : i32, i32
  }
}

</mosaic_0001>

<llo_original>
// kernel: tpu_custom_call.1
$region0: #{tpu_custom_call.1}
  #allocation0 [shape = 'u32[]', space=smem, size = 0x4, offset = 0x4, fixed_abs, tag = 'smem constant byte address 0x4 - core index']
  #allocation1 [shape = 'u32[144,128]{1,0:T(1,128)}', space=vmem, size = 0x12000, scoped, tag = 'internal scratch']
  %s0 = inlined_call_operand.vmem [shape: f32[64,1], index: 0, kind: input, shape index: {}]
  %s1 = inlined_call_operand.vmem [shape: f32[64,1], index: 1, kind: input, shape index: {}]
  %s2 = inlined_call_operand.vmem [shape: f32[64,8], index: 2, kind: input, shape index: {}, may-alias: {2,3}]
  %s3 = inlined_call_operand.vmem [shape: f32[64,8], index: 3, kind: output, shape index: {}, may-alias: {2,3}]
  %s4 = sld [smem:[#allocation0]]
  $region22: #{tpu_custom_call.1} parent=0
    _
  %s6 = ssub.s32 1, %s4
  %s7 = scalar_select 0, %s6, %s4
  // Predicated region
  $region2: #{tpu_custom_call.1} parent=0 // pred_check
    _
  $region3: #{tpu_custom_call.1} parent=0 // pred_check_branch
    %9 = sbr.rel (0) target = $region5
  $region4: #{tpu_custom_call.1} parent=0 // pred_region
    _
  $region5: #{tpu_custom_call.1} parent=0 // pred_fallthru
    _
  // Predicated region
  $region6: #{tpu_custom_call.1} parent=0 // pred_check
    _
  $region7: #{tpu_custom_call.1} parent=0 // pred_check_branch
    %11 = sbr.rel (0) target = $region9
  $region8: #{tpu_custom_call.1} parent=0 // pred_region
    _
  $region9: #{tpu_custom_call.1} parent=0 // pred_fallthru
    _
  // Predicated region
  $region10: #{tpu_custom_call.1} parent=0 // pred_check
    _
  $region11: #{tpu_custom_call.1} parent=0 // pred_check_branch
    %13 = sbr.rel (0) target = $region13
  $region12: #{tpu_custom_call.1} parent=0 // pred_region
    _
  $region13: #{tpu_custom_call.1} parent=0 // pred_fallthru
    _
  %v14 = vlaneseq
  %v15 = vand.u32 %v14, 127
  %v16 = vcvt.s32.f32 %v15
  %s17 = smul.u32 0, 8
  %s18 = scvt.s32.f32 %s17
  %v19 = vstv %s18
  %v20 = vadd.f32 %v16, %v19
  %v21 = vld [vmem:[%s1] sm:$0xff]
  %v22 = vld [vmem:[%s1 + $0x8] sm:$0xff]
  %v23 = vld [vmem:[%s1 + $0x10] sm:$0xff]
  %v24 = vld [vmem:[%s1 + $0x18] sm:$0xff]
  %v25 = vld [vmem:[%s1 + $0x20] sm:$0xff]
  %v26 = vld [vmem:[%s1 + $0x28] sm:$0xff]
  %v27 = vld [vmem:[%s1 + $0x30] sm:$0xff]
  %v28 = vld [vmem:[%s1 + $0x38] sm:$0xff]
  %30 = vset.pattern.permute.xlu0 0
  %31 = vperm.xlu0 %30, %v21
  %v32 = vpop.permute.xlu0 %31
  %35 = vset.pattern.permute.xlu0 0
  %36 = vperm.xlu0 %35, %v22
  %v37 = vpop.permute.xlu0 %36
  %40 = vset.pattern.permute.xlu0 0
  %41 = vperm.xlu0 %40, %v23
  %v42 = vpop.permute.xlu0 %41
  %45 = vset.pattern.permute.xlu0 0
  %46 = vperm.xlu0 %45, %v24
  %v47 = vpop.permute.xlu0 %46
  %50 = vset.pattern.permute.xlu0 0
  %51 = vperm.xlu0 %50, %v25
  %v52 = vpop.permute.xlu0 %51
  %55 = vset.pattern.permute.xlu0 0
  %56 = vperm.xlu0 %55, %v26
  %v57 = vpop.permute.xlu0 %56
  %60 = vset.pattern.permute.xlu0 0
  %61 = vperm.xlu0 %60, %v27
  %v62 = vpop.permute.xlu0 %61
  %65 = vset.pattern.permute.xlu0 0
  %66 = vperm.xlu0 %65, %v28
  %v67 = vpop.permute.xlu0 %66
  %v69 = vsub.f32 %v20, %v32
  %v70 = vsub.f32 %v20, %v37
  %v71 = vsub.f32 %v20, %v42
  %v72 = vsub.f32 %v20, %v47
  %v73 = vsub.f32 %v20, %v52
  %v74 = vsub.f32 %v20, %v57
  %v75 = vsub.f32 %v20, %v62
  %v76 = vsub.f32 %v20, %v67
  %v77 = vld [vmem:[%s2] sm:$0xff]
  %v78 = vld [vmem:[%s2 + $0x8] sm:$0xff]
  %v79 = vld [vmem:[%s2 + $0x10] sm:$0xff]
  %v80 = vld [vmem:[%s2 + $0x18] sm:$0xff]
  %v81 = vld [vmem:[%s2 + $0x20] sm:$0xff]
  %v82 = vld [vmem:[%s2 + $0x28] sm:$0xff]
  %v83 = vld [vmem:[%s2 + $0x30] sm:$0xff]
  %v84 = vld [vmem:[%s2 + $0x38] sm:$0xff]
  %v85 = vld [vmem:[%s0] sm:$0xff]
  %v86 = vld [vmem:[%s0 + $0x8] sm:$0xff]
  %v87 = vld [vmem:[%s0 + $0x10] sm:$0xff]
  %v88 = vld [vmem:[%s0 + $0x18] sm:$0xff]
  %v89 = vld [vmem:[%s0 + $0x20] sm:$0xff]
  %v90 = vld [vmem:[%s0 + $0x28] sm:$0xff]
  %v91 = vld [vmem:[%s0 + $0x30] sm:$0xff]
  %v92 = vld [vmem:[%s0 + $0x38] sm:$0xff]
  %v93 = vand.u32 2147483647, %v69
  %v94 = vand.u32 2147483647, %v70
  %v95 = vand.u32 2147483647, %v71
  %v96 = vand.u32 2147483647, %v72
  %v97 = vand.u32 2147483647, %v73
  %v98 = vand.u32 2147483647, %v74
  %v99 = vand.u32 2147483647, %v75
  %v100 = vand.u32 2147483647, %v76
  %102 = vset.pattern.permute.xlu0 0
  %103 = vperm.xlu0 %102, %v85
  %v104 = vpop.permute.xlu0 %103
  %107 = vset.pattern.permute.xlu0 0
  %108 = vperm.xlu0 %107, %v86
  %v109 = vpop.permute.xlu0 %108
  %112 = vset.pattern.permute.xlu0 0
  %113 = vperm.xlu0 %112, %v87
  %v114 = vpop.permute.xlu0 %113
  %117 = vset.pattern.permute.xlu0 0
  %118 = vperm.xlu0 %117, %v88
  %v119 = vpop.permute.xlu0 %118
  %122 = vset.pattern.permute.xlu0 0
  %123 = vperm.xlu0 %122, %v89
  %v124 = vpop.permute.xlu0 %123
  %127 = vset.pattern.permute.xlu0 0
  %128 = vperm.xlu0 %127, %v90
  %v129 = vpop.permute.xlu0 %128
  %132 = vset.pattern.permute.xlu0 0
  %133 = vperm.xlu0 %132, %v91
  %v134 = vpop.permute.xlu0 %133
  %137 = vset.pattern.permute.xlu0 0
  %138 = vperm.xlu0 %137, %v92
  %v139 = vpop.permute.xlu0 %138
  %v141 = vmul.f32 %v104, %v93
  %v142 = vmul.f32 %v109, %v94
  %v143 = vmul.f32 %v114, %v95
  %v144 = vmul.f32 %v119, %v96
  %v145 = vmul.f32 %v124, %v97
  %v146 = vmul.f32 %v129, %v98
  %v147 = vmul.f32 %v134, %v99
  %v148 = vmul.f32 %v139, %v100
  %v149 = vsub.f32 %v77, %v141
  %v150 = vsub.f32 %v78, %v142
  %v151 = vsub.f32 %v79, %v143
  %v152 = vsub.f32 %v80, %v144
  %v153 = vsub.f32 %v81, %v145
  %v154 = vsub.f32 %v82, %v146
  %v155 = vsub.f32 %v83, %v147
  %v156 = vsub.f32 %v84, %v148
  %vm157 = vcmask 64512
  %158 = vst.msk [vmem:[%s3] sm:$0xff] %vm157, %v149
  %159 = vst.msk [vmem:[%s3 + $0x8] sm:$0xff] %vm157, %v150
  %160 = vst.msk [vmem:[%s3 + $0x10] sm:$0xff] %vm157, %v151
  %161 = vst.msk [vmem:[%s3 + $0x18] sm:$0xff] %vm157, %v152
  %162 = vst.msk [vmem:[%s3 + $0x20] sm:$0xff] %vm157, %v153
  %163 = vst.msk [vmem:[%s3 + $0x28] sm:$0xff] %vm157, %v154
  %164 = vst.msk [vmem:[%s3 + $0x30] sm:$0xff] %vm157, %v155
  %165 = vst.msk [vmem:[%s3 + $0x38] sm:$0xff] %vm157, %v156
  // Predicated region
  $region14: #{tpu_custom_call.1} parent=0 // pred_check
    _
  $region15: #{tpu_custom_call.1} parent=0 // pred_check_branch
    %167 = sbr.rel (0) target = $region17
  $region16: #{tpu_custom_call.1} parent=0 // pred_region
    _
  $region17: #{tpu_custom_call.1} parent=0 // pred_fallthru
    _
  // Predicated region
  $region18: #{tpu_custom_call.1} parent=0 // pred_check
    _
  $region19: #{tpu_custom_call.1} parent=0 // pred_check_branch
    %169 = sbr.rel (0) target = $region21
  $region20: #{tpu_custom_call.1} parent=0 // pred_region
    _
  $region21: #{tpu_custom_call.1} parent=0 // pred_fallthru
    _

</llo_original>
